<compile_context>
chip_gen: v5e
topology: v5e:2x2
jax: 0.10.0
libtpu: 0.0.40
codegen_flags: <defaults>
</compile_context>

<pallas_src>
import jax
import jax.numpy as jnp
from jax.experimental import pallas as pl
from jax.experimental.pallas import tpu as pltpu


LANE = 128  # TPU lane width; feature dims are padded to a multiple of this.


def clip_loss_kernel(scale_ref, labels_ref, img_ref, txt_ref,
                     wimg_ref, wtxt_ref, loss_ref):
    # --- encoders (MXU matmuls, f32 accumulate) ---
    img_e = jnp.dot(img_ref[...], wimg_ref[...],
                    preferred_element_type=jnp.float32)          # (B, Dp)
    txt_e = jnp.dot(txt_ref[...], wtxt_ref[...],
                    preferred_element_type=jnp.float32)          # (B, Dp)

    # --- L2 normalize along the feature dim (zero-padded cols add nothing) ---
    img_n = img_e * jax.lax.rsqrt(
        jnp.sum(img_e * img_e, axis=-1, keepdims=True) + 1e-12)
    txt_n = txt_e * jax.lax.rsqrt(
        jnp.sum(txt_e * txt_e, axis=-1, keepdims=True) + 1e-12)

    # Fold the logit scale into the small (B, Dp) operand, not the (B, B) result.
    img_n = img_n * scale_ref[0, 0]

    # logits_per_image = scale * img_n @ txt_n.T, expressed as an NT dot_general
    # (contract both operands on the lane axis) so no explicit transpose is
    # materialized.  bf16 MXU operands, f32 accumulation.
    logits = jax.lax.dot_general(
        img_n.astype(jnp.bfloat16), txt_n.astype(jnp.bfloat16),
        dimension_numbers=(((1,), (1,)), ((), ())),
        preferred_element_type=jnp.float32)                      # (B, B) f32
    # logits_per_text = logits.T (returned by CLIP, unused by this loss).

    # --- cross entropy over rows of logits_per_image (mean reduction, f32) ---
    # TODO(synk): at production batch sizes, tile this flash-style over a grid
    # with online max/LSE accumulators (mandatory on v7x: 64 MiB VMEM, 2 TCs).
    m = jnp.max(logits, axis=-1, keepdims=True)
    lse = jnp.log(jnp.sum(jnp.exp(logits - m), axis=-1, keepdims=True)) + m   # (B,1)

    col = jax.lax.broadcasted_iota(jnp.int32, logits.shape, 1)                # (B,B)
    onehot = (col == labels_ref[...]).astype(jnp.float32)                     # labels (B,1)
    tgt = jnp.sum(onehot * logits, axis=-1, keepdims=True)                    # (B,1)

    loss_ref[0, 0] = jnp.mean(lse - tgt)


def _resize_pool_matrix(n_in, n_resize=224, n_pool=8):
    """(n_in, n_pool) matrix == 1-D bilinear resize n_in->n_resize then mean-pool.

    jax.image.resize bilinear is separable, so the 2-D spatial map is the outer
    product of two of these 1-D maps.
    """
    r = jax.image.resize(jnp.eye(n_in, dtype=jnp.float32), (n_in, n_resize),
                         method="bilinear")                       # r[h, x]
    return r.reshape(n_in, n_pool, n_resize // n_pool).mean(axis=-1)  # (n_in, n_pool)


def _pad_cols(x, multiple=LANE):
    pad = (-x.shape[-1]) % multiple
    if pad == 0:
        return x
    return jnp.pad(x, [(0, 0)] * (x.ndim - 1) + [(0, pad)])


def clip_loss(image, text, labels, w_img, w_txt, logit_scale):
    """image: (B, C, H, W) f32 NCHW; text: (B, Ft) f32; labels: (B,) int32."""
    B, C, H, W = image.shape
    Fi, D = w_img.shape          # Fi == C * 64 (8x8 pooled patches, flattened)
    Ft = w_txt.shape[0]

    # ---- fold Resize(224,224) + 28x28 avg-pool + flatten + W_img into a single
    #      precomputed linear map on the raw pixels (all steps are linear) ----
    a_h = _resize_pool_matrix(H)                                  # (H, 8)
    a_w = _resize_pool_matrix(W)                                  # (W, 8)
    w_comb = jnp.einsum('hi,wj,cijd->chwd', a_h, a_w,
                        w_img.reshape(C, 8, 8, D)).reshape(C * H * W, D)

    # ---- zero-pad feature dims to the 128-lane width (math unchanged) ----
    w_comb_p = _pad_cols(w_comb)                                  # (C*H*W, Dp)
    w_txt_p = _pad_cols(jnp.pad(w_txt, ((0, (-Ft) % LANE), (0, 0))))   # (Ftp, Dp)
    txt_p = _pad_cols(text.astype(jnp.float32))                   # (B, Ftp)

    pixels = image.reshape(B, C * H * W).astype(jnp.float32)      # (B, C*H*W)
    scale = jnp.full((1, 1), logit_scale, dtype=jnp.float32)
    labels2d = labels.reshape(B, 1).astype(jnp.int32)

    loss = pl.pallas_call(
        clip_loss_kernel,
        out_shape=jax.ShapeDtypeStruct((1, 1), jnp.float32),
        in_specs=[
            pl.BlockSpec(memory_space=pltpu.MemorySpace.SMEM),   # logit scale
            pl.BlockSpec(memory_space=pltpu.MemorySpace.VMEM),   # labels (B, 1)
            pl.BlockSpec(memory_space=pltpu.MemorySpace.VMEM),   # raw pixels (B, C*H*W)
            pl.BlockSpec(memory_space=pltpu.MemorySpace.VMEM),   # txt feats (B, Ftp)
            pl.BlockSpec(memory_space=pltpu.MemorySpace.VMEM),   # W_combined (C*H*W, Dp)
            pl.BlockSpec(memory_space=pltpu.MemorySpace.VMEM),   # W_txt (Ftp, Dp)
        ],
        out_specs=pl.BlockSpec(memory_space=pltpu.MemorySpace.SMEM),
    )(scale, labels2d, pixels, txt_p, w_comb_p, w_txt_p)

    return loss[0, 0]


def reference_loss(image, text, labels, w_img, w_txt, logit_scale):
    """Plain-JAX f32 reference: explicit resize -> pool -> flatten -> CLIP loss."""
    B, C, H, W = image.shape
    img224 = jax.image.resize(image, (B, C, 224, 224), method="bilinear")
    pooled = img224.reshape(B, C, 8, 28, 8, 28).mean(axis=(3, 5))
    img_flat = pooled.reshape(B, C * 64)
    img_e = img_flat @ w_img
    txt_e = text @ w_txt
    img_n = img_e / jnp.linalg.norm(img_e, axis=-1, keepdims=True)
    txt_n = txt_e / jnp.linalg.norm(txt_e, axis=-1, keepdims=True)
    logits = logit_scale * img_n @ txt_n.T
    logp = jax.nn.log_softmax(logits, axis=-1)
    return -jnp.mean(logp[jnp.arange(B), labels])


if __name__ == "__main__":
    key = jax.random.PRNGKey(0)
    k_img, k_txt, k_wi, k_wt, k_lab = jax.random.split(key, 5)

    B, C, H, W = 8, 3, 16, 16        # small NCHW image
    Ft, D = 64, 32                   # text feature dim, embed dim
    Fi = C * 64                      # image features after pool+flatten (192)

    image = jax.random.normal(k_img, (B, C, H, W), dtype=jnp.float32)
    text = jax.random.normal(k_txt, (B, Ft), dtype=jnp.float32)
    labels = jax.random.randint(k_lab, (B,), 0, B, dtype=jnp.int32)

    w_img = 0.02 * jax.random.normal(k_wi, (Fi, D), dtype=jnp.float32)
    w_txt = 0.02 * jax.random.normal(k_wt, (Ft, D), dtype=jnp.float32)
    logit_scale = float(1.0 / 0.07)  # CLIP's exp(log(1/0.07))

    loss = jax.block_until_ready(
        clip_loss(image, text, labels, w_img, w_txt, logit_scale))
    ref = reference_loss(image, text, labels, w_img, w_txt, logit_scale)

    assert jnp.isfinite(loss), "non-finite loss"
    # bf16 MXU operands on the similarity matmul -> slightly looser tolerance.
    assert jnp.allclose(loss, ref, rtol=1e-2, atol=3e-2), (loss, ref)
    print("KERNEL_OK")
</pallas_src>

<mosaic_0001>
module attributes {stable_mosaic.version = 11 : i64} {
  func.func @clip_loss_kernel(%arg0: memref<1x1xf32, #tpu.memory_space<smem>>, %arg1: memref<8x1xi32, #tpu.memory_space<vmem>>, %arg2: memref<8x768xf32, #tpu.memory_space<vmem>>, %arg3: memref<8x128xf32, #tpu.memory_space<vmem>>, %arg4: memref<768x128xf32, #tpu.memory_space<vmem>>, %arg5: memref<128x128xf32, #tpu.memory_space<vmem>>, %arg6: memref<1x1xf32, #tpu.memory_space<smem>>) attributes {dimension_semantics = [], scalar_prefetch = 0 : i64, scratch_operands = 0 : i64, tpu.core_type = #tpu.core_type<tc>} {
    %c0 = arith.constant 0 : index
    %c0_0 = arith.constant 0 : index
    %0 = vector.load %arg2[%c0, %c0_0] : memref<8x768xf32, #tpu.memory_space<vmem>>, vector<8x768xf32>
    %c0_1 = arith.constant 0 : index
    %c0_2 = arith.constant 0 : index
    %1 = vector.load %arg4[%c0_1, %c0_2] : memref<768x128xf32, #tpu.memory_space<vmem>>, vector<768x128xf32>
    %cst = arith.constant dense<0.000000e+00> : vector<8x128xf32>
    %2 = tpu.matmul %0, %1, %cst {dimension_numbers = #tpu.dot_dimension_numbers<[1], [0], [0], [1], [0, 0, 1, 1], [], []>} : vector<8x768xf32>, vector<768x128xf32>, vector<8x128xf32> -> vector<8x128xf32>
    %c0_3 = arith.constant 0 : index
    %c0_4 = arith.constant 0 : index
    %3 = vector.load %arg3[%c0_3, %c0_4] : memref<8x128xf32, #tpu.memory_space<vmem>>, vector<8x128xf32>
    %c0_5 = arith.constant 0 : index
    %c0_6 = arith.constant 0 : index
    %4 = vector.load %arg5[%c0_5, %c0_6] : memref<128x128xf32, #tpu.memory_space<vmem>>, vector<128x128xf32>
    %cst_7 = arith.constant dense<0.000000e+00> : vector<8x128xf32>
    %5 = tpu.matmul %3, %4, %cst_7 {dimension_numbers = #tpu.dot_dimension_numbers<[1], [0], [0], [1], [0, 0, 1, 1], [], []>} : vector<8x128xf32>, vector<128x128xf32>, vector<8x128xf32> -> vector<8x128xf32>
    %6 = arith.mulf %2, %2 : vector<8x128xf32>
    %cst_8 = arith.constant dense<0.000000e+00> : vector<8xf32>
    %7 = vector.multi_reduction <add>, %6, %cst_8 [1] : vector<8x128xf32> to vector<8xf32>
    %8 = vector.shape_cast %7 : vector<8xf32> to vector<8x1xf32>
    %cst_9 = arith.constant 9.99999996E-13 : f32
    %9 = vector.broadcast %cst_9 : f32 to vector<8x1xf32>
    %10 = arith.addf %8, %9 : vector<8x1xf32>
    %11 = math.rsqrt %10 : vector<8x1xf32>
    %12 = vector.broadcast %11 : vector<8x1xf32> to vector<8x128xf32>
    %13 = arith.mulf %2, %12 : vector<8x128xf32>
    %14 = arith.mulf %5, %5 : vector<8x128xf32>
    %cst_10 = arith.constant dense<0.000000e+00> : vector<8xf32>
    %15 = vector.multi_reduction <add>, %14, %cst_10 [1] : vector<8x128xf32> to vector<8xf32>
    %16 = vector.shape_cast %15 : vector<8xf32> to vector<8x1xf32>
    %cst_11 = arith.constant 9.99999996E-13 : f32
    %17 = vector.broadcast %cst_11 : f32 to vector<8x1xf32>
    %18 = arith.addf %16, %17 : vector<8x1xf32>
    %19 = math.rsqrt %18 : vector<8x1xf32>
    %20 = vector.broadcast %19 : vector<8x1xf32> to vector<8x128xf32>
    %21 = arith.mulf %5, %20 : vector<8x128xf32>
    %c0_12 = arith.constant 0 : index
    %c0_13 = arith.constant 0 : index
    %22 = memref.load %arg0[%c0_12, %c0_13] : memref<1x1xf32, #tpu.memory_space<smem>>
    %23 = vector.broadcast %22 : f32 to vector<8x128xf32>
    %24 = arith.mulf %13, %23 : vector<8x128xf32>
    %25 = arith.truncf %24 : vector<8x128xf32> to vector<8x128xbf16>
    %26 = arith.truncf %21 : vector<8x128xf32> to vector<8x128xbf16>
    %cst_14 = arith.constant dense<0.000000e+00> : vector<8x8xf32>
    %27 = tpu.matmul %25, %26, %cst_14 {dimension_numbers = #tpu.dot_dimension_numbers<[1], [1], [0], [0], [0, 0, 1, 0], [], []>} : vector<8x128xbf16>, vector<8x128xbf16>, vector<8x8xf32> -> vector<8x8xf32>
    %cst_15 = arith.constant dense<0xFF800000> : vector<8xf32>
    %28 = vector.multi_reduction <maximumf>, %27, %cst_15 [1] : vector<8x8xf32> to vector<8xf32>
    %29 = vector.shape_cast %28 : vector<8xf32> to vector<8x1xf32>
    %30 = vector.broadcast %29 : vector<8x1xf32> to vector<8x8xf32>
    %31 = arith.subf %27, %30 : vector<8x8xf32>
    %32 = math.exp %31 : vector<8x8xf32>
    %cst_16 = arith.constant dense<0.000000e+00> : vector<8xf32>
    %33 = vector.multi_reduction <add>, %32, %cst_16 [1] : vector<8x8xf32> to vector<8xf32>
    %34 = vector.shape_cast %33 : vector<8xf32> to vector<8x1xf32>
    %35 = math.log %34 : vector<8x1xf32>
    %36 = arith.addf %35, %29 : vector<8x1xf32>
    %37 = tpu.iota {dimensions = array<i32: 1>} : vector<8x8xi32>
    %c0_17 = arith.constant 0 : index
    %c0_18 = arith.constant 0 : index
    %38 = vector.load %arg1[%c0_17, %c0_18] : memref<8x1xi32, #tpu.memory_space<vmem>>, vector<8x1xi32>
    %39 = vector.broadcast %38 : vector<8x1xi32> to vector<8x8xi32>
    %40 = arith.cmpi eq, %37, %39 : vector<8x8xi32>
    %41 = arith.extui %40 : vector<8x8xi1> to vector<8x8xi32>
    %42 = arith.sitofp %41 : vector<8x8xi32> to vector<8x8xf32>
    %43 = arith.mulf %42, %27 : vector<8x8xf32>
    %cst_19 = arith.constant dense<0.000000e+00> : vector<8xf32>
    %44 = vector.multi_reduction <add>, %43, %cst_19 [1] : vector<8x8xf32> to vector<8xf32>
    %45 = vector.shape_cast %44 : vector<8xf32> to vector<8x1xf32>
    %46 = arith.subf %36, %45 : vector<8x1xf32>
    %47 = vector.shape_cast %46 : vector<8x1xf32> to vector<1x8x1xf32>
    %cst_20 = arith.constant dense<0.000000e+00> : vector<1xf32>
    %48 = vector.multi_reduction <add>, %47, %cst_20 [1, 2] : vector<1x8x1xf32> to vector<1xf32>
    %49 = vector.shape_cast %48 : vector<1xf32> to vector<1x1x1xf32>
    %50 = vector.extract %49[0, 0, 0] : f32 from vector<1x1x1xf32>
    %cst_21 = arith.constant 8.000000e+00 : f32
    %51 = arith.divf %50, %cst_21 : f32
    %c0_22 = arith.constant 0 : index
    %c0_23 = arith.constant 0 : index
    %52 = memref.load %arg6[%c0_22, %c0_23] : memref<1x1xf32, #tpu.memory_space<smem>>
    memref.store %51, %arg6[%c0_22, %c0_23] : memref<1x1xf32, #tpu.memory_space<smem>>
    return
  }
}

</mosaic_0001>

<llo_original>
// kernel: tpu_custom_call.1
$region0: #{tpu_custom_call.1}
  #allocation0 [shape = 'u32[]', space=smem, size = 0x4, offset = 0x4, fixed_abs, tag = 'smem constant byte address 0x4 - core index']
  #allocation1 [shape = 'u32[72,128]{1,0:T(1,128)}', space=vmem, size = 0x9000, scoped, tag = 'internal scratch']
  #allocation2 [shape = 'f32[1,1]{1,0:T(1,128)S(6)}', space=smem, size = 0x200, scoped, tag = 'scoped memory for tpu_custom_call.1']
  %s0 = inlined_call_operand.<no memory space> [shape: f32[1,1], index: 0, kind: input, shape index: {}]
  %s1 = inlined_call_operand.vmem [shape: s32[8,1], index: 1, kind: input, shape index: {}]
  %s2 = inlined_call_operand.hbm [shape: f32[8,768], index: 2, kind: input, shape index: {}]
  %s3 = inlined_call_operand.vmem [shape: f32[8,128], index: 3, kind: input, shape index: {}]
  %s4 = inlined_call_operand.hbm [shape: f32[768,128], index: 4, kind: input, shape index: {}]
  %s5 = inlined_call_operand.hbm [shape: f32[128,128], index: 5, kind: input, shape index: {}]
  %s6 = inlined_call_operand.hbm [shape: f32[1,1], index: 6, kind: output, shape index: {}]
  %s7 = sld [smem:[#allocation0]]
  $region46: #{tpu_custom_call.1} parent=0
    _
  %s9 = ssub.s32 1, %s7
  %s10 = scalar_select 0, %s9, %s7
  %11 = sst [smem:[#allocation2]] %s0
  $region1: #{tpu_custom_call.1} parent=0
    #allocation3 [shape = 'u8[24576]{0}', space=vmem, size = 0x6000, scoped, tag = 'input window, operand 2, single buffered']
    #allocation4 [shape = 's32[1]{0}', space=sflag, size = 0x4, scoped, tag = 'scoped memory for tpu_custom_call.1']
    #allocation5 [shape = 's32[1]{0}', space=sflag, size = 0x4, scoped, tag = 'scoped memory for tpu_custom_call.1']
    #allocation6 [shape = 'u8[393216]{0}', space=vmem, size = 0x60000, scoped, tag = 'input window, operand 4, single buffered']
    #allocation7 [shape = 's32[1]{0}', space=sflag, size = 0x4, scoped, tag = 'scoped memory for tpu_custom_call.1']
    #allocation8 [shape = 'u8[65536]{0}', space=vmem, size = 0x10000, scoped, tag = 'input window, operand 5, single buffered']
    #allocation9 [shape = 'u8[512]{0}', space=smem, size = 0x200, scoped, tag = 'output window, operand 0, single buffered']
    %12 = vsyncpa [#allocation4], 0
    %13 = vsyncpa [#allocation7], 0
    %14 = vsyncpa [#allocation5], 0
    // Predicated region
    $region2: #{tpu_custom_call.1} parent=1 // pred_check
      _
    $region3: #{tpu_custom_call.1} parent=1 // pred_check_branch
      %16 = sbr.rel (0) target = $region5
    $region4: #{tpu_custom_call.1} parent=1 // pred_region
      _
    $region5: #{tpu_custom_call.1} parent=1 // pred_fallthru
      _
    // Predicated region
    $region6: #{tpu_custom_call.1} parent=1 // pred_check
      _
    $region7: #{tpu_custom_call.1} parent=1 // pred_check_branch
      %18 = sbr.rel (0) target = $region9
    $region8: #{tpu_custom_call.1} parent=1 // pred_region
      _
    $region9: #{tpu_custom_call.1} parent=1 // pred_fallthru
      _
    // Predicated region
    $region10: #{tpu_custom_call.1} parent=1 // pred_check
      _
    $region11: #{tpu_custom_call.1} parent=1 // pred_check_branch
      %20 = sbr.rel (0) target = $region13
    $region12: #{tpu_custom_call.1} parent=1 // pred_region
      %22 = vsyncadd [#allocation4], 0
      %s24 = sshll.u32 %s2, 4
      %s25 = int_to_ptr.hbm [resolvable:$true] %s24
      %s26 = sshll.u32 [#allocation3], 4
      %s27 = int_to_ptr.vmem [resolvable:$true] %s26
      %29 = dma.hbm_to_vmem [thread:$0]  %s25, 768, %s27, [#allocation4]
    $region13: #{tpu_custom_call.1} parent=1 // pred_fallthru
      _
    // Predicated region
    $region14: #{tpu_custom_call.1} parent=1 // pred_check
      _
    $region15: #{tpu_custom_call.1} parent=1 // pred_check_branch
      %31 = sbr.rel (0) target = $region17
    $region16: #{tpu_custom_call.1} parent=1 // pred_region
      _
    $region17: #{tpu_custom_call.1} parent=1 // pred_fallthru
      _
    // Predicated region
    $region18: #{tpu_custom_call.1} parent=1 // pred_check
      _
    $region19: #{tpu_custom_call.1} parent=1 // pred_check_branch
      %33 = sbr.rel (0) target = $region21
    $region20: #{tpu_custom_call.1} parent=1 // pred_region
      %35 = vsyncadd [#allocation7], 0
      %s36 = sshll.u32 %s4, 4
      %s37 = int_to_ptr.hbm [resolvable:$true] %s36
      %s38 = sshll.u32 [#allocation6], 4
      %s39 = int_to_ptr.vmem [resolvable:$true] %s38
      %44 = dma.hbm_to_vmem [thread:$0]  %s37, 12288, %s39, [#allocation7], 128, 128, 8
    $region21: #{tpu_custom_call.1} parent=1 // pred_fallthru
      _
    // Predicated region
    $region22: #{tpu_custom_call.1} parent=1 // pred_check
      _
    $region23: #{tpu_custom_call.1} parent=1 // pred_check_branch
      %46 = sbr.rel (0) target = $region25
    $region24: #{tpu_custom_call.1} parent=1 // pred_region
      %48 = vsyncadd [#allocation7], 0
      %s49 = sshll.u32 %s5, 4
      %s50 = int_to_ptr.hbm [resolvable:$true] %s49
      %s51 = sshll.u32 [#allocation8], 4
      %s52 = int_to_ptr.vmem [resolvable:$true] %s51
      %57 = dma.hbm_to_vmem [thread:$0]  %s50, 2048, %s52, [#allocation7], 128, 128, 8
    $region25: #{tpu_custom_call.1} parent=1 // pred_fallthru
      _
    // Predicated region
    $region26: #{tpu_custom_call.1} parent=1 // pred_check
      _
    $region27: #{tpu_custom_call.1} parent=1 // pred_check_branch
      %59 = sbr.rel (0) target = $region29
    $region28: #{tpu_custom_call.1} parent=1 // pred_region
      %61 = dma.done [#allocation4], 768
    $region29: #{tpu_custom_call.1} parent=1 // pred_fallthru
      _
    // Predicated region
    $region30: #{tpu_custom_call.1} parent=1 // pred_check
      _
    $region31: #{tpu_custom_call.1} parent=1 // pred_check_branch
      %63 = sbr.rel (0) target = $region33
    $region32: #{tpu_custom_call.1} parent=1 // pred_region
      %65 = dma.done [#allocation7], 12288
    $region33: #{tpu_custom_call.1} parent=1 // pred_fallthru
      _
    // Predicated region
    $region34: #{tpu_custom_call.1} parent=1 // pred_check
      _
    $region35: #{tpu_custom_call.1} parent=1 // pred_check_branch
      %67 = sbr.rel (0) target = $region37
    $region36: #{tpu_custom_call.1} parent=1 // pred_region
      %69 = dma.done [#allocation7], 2048
    $region37: #{tpu_custom_call.1} parent=1 // pred_fallthru
      _
    %v71 = vld [vmem:[#allocation3] sm:$0xff]
    %v72 = vld [vmem:[#allocation3 + $0x8] sm:$0xff]
    %v73 = vld [vmem:[#allocation3 + $0x10] sm:$0xff]
    %v74 = vld [vmem:[#allocation3 + $0x18] sm:$0xff]
    %v75 = vld [vmem:[#allocation3 + $0x20] sm:$0xff]
    %v76 = vld [vmem:[#allocation3 + $0x28] sm:$0xff]
    %v77 = vld [vmem:[#allocation6] sm:$0xff]
    %v78 = vld [vmem:[#allocation6 + $0x8] sm:$0xff]
    %v79 = vld [vmem:[#allocation6 + $0x10] sm:$0xff]
    %v80 = vld [vmem:[#allocation6 + $0x18] sm:$0xff]
    %v81 = vld [vmem:[#allocation6 + $0x20] sm:$0xff]
    %v82 = vld [vmem:[#allocation6 + $0x28] sm:$0xff]
    %v83 = vld [vmem:[#allocation6 + $0x30] sm:$0xff]
    %v84 = vld [vmem:[#allocation6 + $0x38] sm:$0xff]
    %v85 = vld [vmem:[#allocation6 + $0x40] sm:$0xff]
    %v86 = vld [vmem:[#allocation6 + $0x48] sm:$0xff]
    %v87 = vld [vmem:[#allocation6 + $0x50] sm:$0xff]
    %v88 = vld [vmem:[#allocation6 + $0x58] sm:$0xff]
    %v89 = vld [vmem:[#allocation6 + $0x60] sm:$0xff]
    %v90 = vld [vmem:[#allocation6 + $0x68] sm:$0xff]
    %v91 = vld [vmem:[#allocation6 + $0x70] sm:$0xff]
    %v92 = vld [vmem:[#allocation6 + $0x78] sm:$0xff]
    %v93 = vld [vmem:[#allocation6 + $0x80] sm:$0xff]
    %v94 = vld [vmem:[#allocation6 + $0x88] sm:$0xff]
    %v95 = vld [vmem:[#allocation6 + $0x90] sm:$0xff]
    %v96 = vld [vmem:[#allocation6 + $0x98] sm:$0xff]
    %v97 = vld [vmem:[#allocation6 + $0xa0] sm:$0xff]
    %v98 = vld [vmem:[#allocation6 + $0xa8] sm:$0xff]
    %v99 = vld [vmem:[#allocation6 + $0xb0] sm:$0xff]
    %v100 = vld [vmem:[#allocation6 + $0xb8] sm:$0xff]
    %v101 = vld [vmem:[#allocation6 + $0xc0] sm:$0xff]
    %v102 = vld [vmem:[#allocation6 + $0xc8] sm:$0xff]
    %v103 = vld [vmem:[#allocation6 + $0xd0] sm:$0xff]
    %v104 = vld [vmem:[#allocation6 + $0xd8] sm:$0xff]
    %v105 = vld [vmem:[#allocation6 + $0xe0] sm:$0xff]
    %v106 = vld [vmem:[#allocation6 + $0xe8] sm:$0xff]
    %v107 = vld [vmem:[#allocation6 + $0xf0] sm:$0xff]
    %v108 = vld [vmem:[#allocation6 + $0xf8] sm:$0xff]
    %v109 = vld [vmem:[#allocation6 + $0x100] sm:$0xff]
    %v110 = vld [vmem:[#allocation6 + $0x108] sm:$0xff]
    %v111 = vld [vmem:[#allocation6 + $0x110] sm:$0xff]
    %v112 = vld [vmem:[#allocation6 + $0x118] sm:$0xff]
    %v113 = vld [vmem:[#allocation6 + $0x120] sm:$0xff]
    %v114 = vld [vmem:[#allocation6 + $0x128] sm:$0xff]
    %v115 = vld [vmem:[#allocation6 + $0x130] sm:$0xff]
    %v116 = vld [vmem:[#allocation6 + $0x138] sm:$0xff]
    %v117 = vld [vmem:[#allocation6 + $0x140] sm:$0xff]
    %v118 = vld [vmem:[#allocation6 + $0x148] sm:$0xff]
    %v119 = vld [vmem:[#allocation6 + $0x150] sm:$0xff]
    %v120 = vld [vmem:[#allocation6 + $0x158] sm:$0xff]
    %v121 = vld [vmem:[#allocation6 + $0x160] sm:$0xff]
    %v122 = vld [vmem:[#allocation6 + $0x168] sm:$0xff]
    %v123 = vld [vmem:[#allocation6 + $0x170] sm:$0xff]
    %v124 = vld [vmem:[#allocation6 + $0x178] sm:$0xff]
    %v125 = vld [vmem:[#allocation6 + $0x180] sm:$0xff]
    %v126 = vld [vmem:[#allocation6 + $0x188] sm:$0xff]
    %v127 = vld [vmem:[#allocation6 + $0x190] sm:$0xff]
    %v128 = vld [vmem:[#allocation6 + $0x198] sm:$0xff]
    %v129 = vld [vmem:[#allocation6 + $0x1a0] sm:$0xff]
    %v130 = vld [vmem:[#allocation6 + $0x1a8] sm:$0xff]
    %v131 = vld [vmem:[#allocation6 + $0x1b0] sm:$0xff]
    %v132 = vld [vmem:[#allocation6 + $0x1b8] sm:$0xff]
    %v133 = vld [vmem:[#allocation6 + $0x1c0] sm:$0xff]
    %v134 = vld [vmem:[#allocation6 + $0x1c8] sm:$0xff]
    %v135 = vld [vmem:[#allocation6 + $0x1d0] sm:$0xff]
    %v136 = vld [vmem:[#allocation6 + $0x1d8] sm:$0xff]
    %v137 = vld [vmem:[#allocation6 + $0x1e0] sm:$0xff]
    %v138 = vld [vmem:[#allocation6 + $0x1e8] sm:$0xff]
    %v139 = vld [vmem:[#allocation6 + $0x1f0] sm:$0xff]
    %v140 = vld [vmem:[#allocation6 + $0x1f8] sm:$0xff]
    %v141 = vld [vmem:[#allocation6 + $0x200] sm:$0xff]
    %v142 = vld [vmem:[#allocation6 + $0x208] sm:$0xff]
    %v143 = vld [vmem:[#allocation6 + $0x210] sm:$0xff]
    %v144 = vld [vmem:[#allocation6 + $0x218] sm:$0xff]
    %v145 = vld [vmem:[#allocation6 + $0x220] sm:$0xff]
    %v146 = vld [vmem:[#allocation6 + $0x228] sm:$0xff]
    %v147 = vld [vmem:[#allocation6 + $0x230] sm:$0xff]
    %v148 = vld [vmem:[#allocation6 + $0x238] sm:$0xff]
    %v149 = vld [vmem:[#allocation6 + $0x240] sm:$0xff]
    %v150 = vld [vmem:[#allocation6 + $0x248] sm:$0xff]
    %v151 = vld [vmem:[#allocation6 + $0x250] sm:$0xff]
    %v152 = vld [vmem:[#allocation6 + $0x258] sm:$0xff]
    %v153 = vld [vmem:[#allocation6 + $0x260] sm:$0xff]
    %v154 = vld [vmem:[#allocation6 + $0x268] sm:$0xff]
    %v155 = vld [vmem:[#allocation6 + $0x270] sm:$0xff]
    %v156 = vld [vmem:[#allocation6 + $0x278] sm:$0xff]
    %v157 = vld [vmem:[#allocation6 + $0x280] sm:$0xff]
    %v158 = vld [vmem:[#allocation6 + $0x288] sm:$0xff]
    %v159 = vld [vmem:[#allocation6 + $0x290] sm:$0xff]
    %v160 = vld [vmem:[#allocation6 + $0x298] sm:$0xff]
    %v161 = vld [vmem:[#allocation6 + $0x2a0] sm:$0xff]
    %v162 = vld [vmem:[#allocation6 + $0x2a8] sm:$0xff]
    %v163 = vld [vmem:[#allocation6 + $0x2b0] sm:$0xff]
    %v164 = vld [vmem:[#allocation6 + $0x2b8] sm:$0xff]
    %v165 = vld [vmem:[#allocation6 + $0x2c0] sm:$0xff]
    %v166 = vld [vmem:[#allocation6 + $0x2c8] sm:$0xff]
    %v167 = vld [vmem:[#allocation6 + $0x2d0] sm:$0xff]
    %v168 = vld [vmem:[#allocation6 + $0x2d8] sm:$0xff]
    %v169 = vld [vmem:[#allocation6 + $0x2e0] sm:$0xff]
    %v170 = vld [vmem:[#allocation6 + $0x2e8] sm:$0xff]
    %v171 = vld [vmem:[#allocation6 + $0x2f0] sm:$0xff]
    %v172 = vld [vmem:[#allocation6 + $0x2f8] sm:$0xff]
    %173 = vmatpush.msra.mxu0 %v92
    %174 = vmatpush.msra.mxu0 %v91
    %175 = vmatpush.msra.mxu0 %v90
    %176 = vmatpush.msra.mxu0 %v89
    %177 = vmatpush.msra.mxu0 %v88
    %178 = vmatpush.msra.mxu0 %v87
    %179 = vmatpush.msra.mxu0 %v86
    %180 = vmatpush.msra.mxu0 %v85
    %181 = vmatpush.msra.mxu0 %v84
    %182 = vmatpush.msra.mxu0 %v83
    %183 = vmatpush.msra.mxu0 %v82
    %184 = vmatpush.msra.mxu0 %v81
    %185 = vmatpush.msra.mxu0 %v80
    %186 = vmatpush.msra.mxu0 %v79
    %187 = vmatpush.msra.mxu0 %v78
    %188 = vmatpush.msra.mxu0 %v77
    %189 = vmatmul.f32.gmra.mxu0 %v71
    %v190 = vpop.f32.mrf.mxu0
    %v191 = vadd.f32 0.0, %v190
    %192 = vdwg.mxu0
    %193 = vmatpush.msra.mxu0 %v108
    %194 = vmatpush.msra.mxu0 %v107
    %195 = vmatpush.msra.mxu0 %v106
    %196 = vmatpush.msra.mxu0 %v105
    %197 = vmatpush.msra.mxu0 %v104
    %198 = vmatpush.msra.mxu0 %v103
    %199 = vmatpush.msra.mxu0 %v102
    %200 = vmatpush.msra.mxu0 %v101
    %201 = vmatpush.msra.mxu0 %v100
    %202 = vmatpush.msra.mxu0 %v99
    %203 = vmatpush.msra.mxu0 %v98
    %204 = vmatpush.msra.mxu0 %v97
    %205 = vmatpush.msra.mxu0 %v96
    %206 = vmatpush.msra.mxu0 %v95
    %207 = vmatpush.msra.mxu0 %v94
    %208 = vmatpush.msra.mxu0 %v93
    %209 = vmatmul.f32.gmra.mxu0 %v72
    %v210 = vpop.f32.mrf.mxu0
    %v211 = vadd.f32 %v191, %v210
    %212 = vdwg.mxu0
    %213 = vmatpush.msra.mxu0 %v124
    %214 = vmatpush.msra.mxu0 %v123
    %215 = vmatpush.msra.mxu0 %v122
    %216 = vmatpush.msra.mxu0 %v121
    %217 = vmatpush.msra.mxu0 %v120
    %218 = vmatpush.msra.mxu0 %v119
    %219 = vmatpush.msra.mxu0 %v118
    %220 = vmatpush.msra.mxu0 %v117
    %221 = vmatpush.msra.mxu0 %v116
    %222 = vmatpush.msra.mxu0 %v115
    %223 = vmatpush.msra.mxu0 %v114
    %224 = vmatpush.msra.mxu0 %v113
    %225 = vmatpush.msra.mxu0 %v112
    %226 = vmatpush.msra.mxu0 %v111
    %227 = vmatpush.msra.mxu0 %v110
    %228 = vmatpush.msra.mxu0 %v109
    %229 = vmatmul.f32.gmra.mxu0 %v73
    %v230 = vpop.f32.mrf.mxu0
    %v231 = vadd.f32 %v211, %v230
    %232 = vdwg.mxu0
    %233 = vmatpush.msra.mxu0 %v140
    %234 = vmatpush.msra.mxu0 %v139
    %235 = vmatpush.msra.mxu0 %v138
    %236 = vmatpush.msra.mxu0 %v137
    %237 = vmatpush.msra.mxu0 %v136
    %238 = vmatpush.msra.mxu0 %v135
    %239 = vmatpush.msra.mxu0 %v134
    %240 = vmatpush.msra.mxu0 %v133
    %241 = vmatpush.msra.mxu0 %v132
    %242 = vmatpush.msra.mxu0 %v131
    %243 = vmatpush.msra.mxu0 %v130
    %244 = vmatpush.msra.mxu0 %v129
    %245 = vmatpush.msra.mxu0 %v128
    %246 = vmatpush.msra.mxu0 %v127
    %247 = vmatpush.msra.mxu0 %v126
    %248 = vmatpush.msra.mxu0 %v125
    %249 = vmatmul.f32.gmra.mxu0 %v74
    %v250 = vpop.f32.mrf.mxu0
    %v251 = vadd.f32 %v231, %v250
    %252 = vdwg.mxu0
    %253 = vmatpush.msra.mxu0 %v156
    %254 = vmatpush.msra.mxu0 %v155
    %255 = vmatpush.msra.mxu0 %v154
    %256 = vmatpush.msra.mxu0 %v153
    %257 = vmatpush.msra.mxu0 %v152
    %258 = vmatpush.msra.mxu0 %v151
    %259 = vmatpush.msra.mxu0 %v150
    %260 = vmatpush.msra.mxu0 %v149
    %261 = vmatpush.msra.mxu0 %v148
    %262 = vmatpush.msra.mxu0 %v147
    %263 = vmatpush.msra.mxu0 %v146
    %264 = vmatpush.msra.mxu0 %v145
    %265 = vmatpush.msra.mxu0 %v144
    %266 = vmatpush.msra.mxu0 %v143
    %267 = vmatpush.msra.mxu0 %v142
    %268 = vmatpush.msra.mxu0 %v141
    %269 = vmatmul.f32.gmra.mxu0 %v75
    %v270 = vpop.f32.mrf.mxu0
    %v271 = vadd.f32 %v251, %v270
    %272 = vdwg.mxu0
    %273 = vmatpush.msra.mxu0 %v172
    %274 = vmatpush.msra.mxu0 %v171
    %275 = vmatpush.msra.mxu0 %v170
    %276 = vmatpush.msra.mxu0 %v169
    %277 = vmatpush.msra.mxu0 %v168
    %278 = vmatpush.msra.mxu0 %v167
    %279 = vmatpush.msra.mxu0 %v166
    %280 = vmatpush.msra.mxu0 %v165
    %281 = vmatpush.msra.mxu0 %v164
    %282 = vmatpush.msra.mxu0 %v163
    %283 = vmatpush.msra.mxu0 %v162
    %284 = vmatpush.msra.mxu0 %v161
    %285 = vmatpush.msra.mxu0 %v160
    %286 = vmatpush.msra.mxu0 %v159
    %287 = vmatpush.msra.mxu0 %v158
    %288 = vmatpush.msra.mxu0 %v157
    %289 = vmatmul.f32.gmra.mxu0 %v76
    %v290 = vpop.f32.mrf.mxu0
    %v291 = vadd.f32 %v271, %v290
    %292 = vdwg.mxu0
    %v293 = vld [vmem:[%s3] sm:$0xff]
    %v294 = vld [vmem:[#allocation8] sm:$0xff]
    %v295 = vld [vmem:[#allocation8 + $0x8] sm:$0xff]
    %v296 = vld [vmem:[#allocation8 + $0x10] sm:$0xff]
    %v297 = vld [vmem:[#allocation8 + $0x18] sm:$0xff]
    %v298 = vld [vmem:[#allocation8 + $0x20] sm:$0xff]
    %v299 = vld [vmem:[#allocation8 + $0x28] sm:$0xff]
    %v300 = vld [vmem:[#allocation8 + $0x30] sm:$0xff]
    %v301 = vld [vmem:[#allocation8 + $0x38] sm:$0xff]
    %v302 = vld [vmem:[#allocation8 + $0x40] sm:$0xff]
    %v303 = vld [vmem:[#allocation8 + $0x48] sm:$0xff]
    %v304 = vld [vmem:[#allocation8 + $0x50] sm:$0xff]
    %v305 = vld [vmem:[#allocation8 + $0x58] sm:$0xff]
    %v306 = vld [vmem:[#allocation8 + $0x60] sm:$0xff]
    %v307 = vld [vmem:[#allocation8 + $0x68] sm:$0xff]
    %v308 = vld [vmem:[#allocation8 + $0x70] sm:$0xff]
    %v309 = vld [vmem:[#allocation8 + $0x78] sm:$0xff]
    %310 = vmatpush.msra.mxu0 %v309
    %311 = vmatpush.msra.mxu0 %v308
    %312 = vmatpush.msra.mxu0 %v307
    %313 = vmatpush.msra.mxu0 %v306
    %314 = vmatpush.msra.mxu0 %v305
    %315 = vmatpush.msra.mxu0 %v304
    %316 = vmatpush.msra.mxu0 %v303
    %317 = vmatpush.msra.mxu0 %v302
    %318 = vmatpush.msra.mxu0 %v301
    %319 = vmatpush.msra.mxu0 %v300
    %320 = vmatpush.msra.mxu0 %v299
    %321 = vmatpush.msra.mxu0 %v298
    %322 = vmatpush.msra.mxu0 %v297
    %323 = vmatpush.msra.mxu0 %v296
    %324 = vmatpush.msra.mxu0 %v295
    %325 = vmatpush.msra.mxu0 %v294
    %326 = vmatmul.f32.gmra.mxu0 %v293
    %v327 = vpop.f32.mrf.mxu0
    %v328 = vadd.f32 0.0, %v327
    %329 = vdwg.mxu0
    %v330 = vmul.f32 %v291, %v291
    %331 = vadd.xlane.f32.xlu0 %v330
    %v332 = vpop.xlane.xlu0 %331
    %v333 = vadd.f32 %v332, 1e-12
    %v334 = vrsqrt.pop %v333
    %v335 = vmul.f32 %v334, %v333
    %v336 = vmul.f32 %v335, %v334
    %v337 = vmul.f32 0.5, %v336
    %v338 = vsub.f32 1.5, %v337
    %v339 = vmul.f32 %v334, %v338
    %vm340 = vweird.f32 %v333
    %vm341 = vweird.f32 %v334
    %vm342 = vmor %vm340, %vm341
    %v343 = vsel %vm342, %v334, %v339
    %v344 = vmul.f32 %v291, %v343
    %v345 = vmul.f32 %v328, %v328
    %346 = vadd.xlane.f32.xlu0 %v345
    %v347 = vpop.xlane.xlu0 %346
    %v348 = vadd.f32 %v347, 1e-12
    %v349 = vrsqrt.pop %v348
    %v350 = vmul.f32 %v349, %v348
    %v351 = vmul.f32 %v350, %v349
    %v352 = vmul.f32 0.5, %v351
    %v353 = vsub.f32 1.5, %v352
    %v354 = vmul.f32 %v349, %v353
    %vm355 = vweird.f32 %v348
    %vm356 = vweird.f32 %v349
    %vm357 = vmor %vm355, %vm356
    %v358 = vsel %vm357, %v349, %v354
    %v359 = vmul.f32 %v328, %v358
    %s360 = sld [smem:[#allocation2]]
    %v361 = vstv %s360
    %v362 = vmul.f32 %v344, %v361
    %v363 = vpack.c.bf16 %v362, %v362
    %v364 = vpack.c.bf16 %v359, %v359
    %365 = vmatpush.bf16.xpose.msra.mxu0 0
    %366 = vmatpush.bf16.xpose.msra.mxu0 0
    %367 = vmatpush.bf16.xpose.msra.mxu0 0
    %368 = vmatpush.bf16.xpose.msra.mxu0 0
    %369 = vmatpush.bf16.xpose.msra.mxu0 0
    %370 = vmatpush.bf16.xpose.msra.mxu0 0
    %371 = vmatpush.bf16.xpose.msra.mxu0 0
    %372 = vmatpush.bf16.xpose.msra.mxu0 %v364
    %373 = vmatmul.bf16.gmra.mxu0 %v363
    %v374 = vpop.f32.mrf.mxu0
    %v375 = vadd.f32 0.0, %v374
    %v376 = vpop.f32.mrf.mxu0
    %377 = vdwg.mxu0
    %vm378 = vcmask 64512
    %v379 = vsel %vm378, %v375, -inf
    %380 = vmax.xlane.f32.xlu0 %v379
    %v381 = vpop.xlane.xlu0 %380
    %v382 = vsub.f32 %v375, %v381
    %v383 = vmul.f32 %v382, 1.442695
    %v384 = vpow.pop %v383
    %v385 = vsel %vm378, %v384, 0.0
    %386 = vadd.xlane.f32.xlu0 %v385
    %v387 = vpop.xlane.xlu0 %386
    %v388 = vlog2.pop %v387
    %v389 = vmul.f32 %v388, 0.6931472
    %v390 = vadd.f32 %v389, %v381
    %v391 = vlaneseq
    %v392 = vand.u32 %v391, 127
    %v393 = vld [vmem:[%s1] sm:$0xff]
    %394 = vset.pattern.permute.xlu0 0
    %395 = vperm.xlu0 %394, %v393
    %v396 = vpop.permute.xlu0 %395
    %vm397 = vcmp.eq.s32.totalorder %v392, %v396
    %v398 = vsel %vm397, 1, 0
    %v399 = vcvt.s32.f32 %v398
    %v400 = vmul.f32 %v399, %v375
    %v401 = vsel %vm378, %v400, 0.0
    %402 = vadd.xlane.f32.xlu0 %v401
    %v403 = vpop.xlane.xlu0 %402
    %v404 = vsub.f32 %v390, %v403
    %vm405 = vcmask 7168
    %v406 = vsel %vm405, %v404, 0.0
    %407 = vadd.xlane.f32.xlu0 %v406
    %v408 = vpop.xlane.xlu0 %407
    %v409 = vrot.slane %v408, 4
    %v410 = vadd.f32 %v408, %v409
    %v411 = vrot.slane %v410, 2
    %v412 = vadd.f32 %v410, %v411
    %v413 = vrot.slane %v412, 1
    %v414 = vadd.f32 %v412, %v413
    %s415 = vtos %v414
    %v416 = vrcp.pop 8.0
    %v417 = vmul.f32 8.0, %v416
    %v418 = vsub.f32 1.0, %v417
    %v419 = vmul.f32 %v416, %v418
    %v420 = vadd.f32 %v416, %v419
    %vm421 = vweird.f32 %v416
    %v422 = vsel %vm421, %v416, %v420
    %s423 = vtos %v422
    %s424 = smul.f32 %s415, %s423
    %s425 = scalar_lea.smem [#allocation9], 0
    %426 = sst [smem:[%s425]] %s424
    // Predicated region
    $region38: #{tpu_custom_call.1} parent=1 // pred_check
      _
    $region39: #{tpu_custom_call.1} parent=1 // pred_check_branch
      %428 = sbr.rel (0) target = $region41
    $region40: #{tpu_custom_call.1} parent=1 // pred_region
      %430 = vsyncadd [#allocation5], 0
      %s432 = sshll.u32 %s6, 4
      %s433 = int_to_ptr.hbm [resolvable:$true] %s432
      %435 = dma.smem_to_hbm [#allocation9], 16, %s433, [#allocation5]
    $region41: #{tpu_custom_call.1} parent=1 // pred_fallthru
      _
    // Predicated region
    $region42: #{tpu_custom_call.1} parent=1 // pred_check
      _
    $region43: #{tpu_custom_call.1} parent=1 // pred_check_branch
      %437 = sbr.rel (0) target = $region45
    $region44: #{tpu_custom_call.1} parent=1 // pred_region
      %439 = dma.done [#allocation5], 16
    $region45: #{tpu_custom_call.1} parent=1 // pred_fallthru
      _
    %440 = sfence
    %441 = vsyncpa [#allocation4], 1
    %442 = vsyncpa [#allocation7], 1
    %443 = vsyncpa [#allocation5], 1

</llo_original>
